<compile_context>
chip_gen: v7x
topology: tpu7x:2x2x1
jax: 0.10.0
libtpu: 0.0.40
codegen_flags: <defaults>
</compile_context>

<pallas_src>
import jax
import jax.numpy as jnp
from jax import lax
from jax.experimental import pallas as pl
from jax.experimental.pallas import tpu as pltpu


def _make_kernel(n_layers, F, LR, ns, bt):
    nLF = n_layers * F

    def kernel(p_ref, w_ref, b_ref, out_ref):
        # Fused conv-as-matmul for all layers and all bt batch elements:
        #   (nLF, Ckk) @ (Ckk, bt*LR) -> (nLF, bt*LR) on the MXU, f32 accumulate.
        z = jnp.dot(w_ref[...], p_ref[...], preferred_element_type=jnp.float32)
        z = jnp.tanh(z + b_ref[...])                 # bias (nLF, 1) broadcasts on lanes
        neg_inf = jnp.float32(-jnp.inf)
        for b in range(bt):                          # static unroll over batch in block
            vals = z[:, b * LR:(b + 1) * LR]         # lane-aligned (nLF, LR) segment
            for j in range(ns):                      # iterative top-ns (descending)
                m = jnp.max(vals, axis=-1, keepdims=True)     # (nLF, 1): one reduction
                out_ref[0, j * nLF:(j + 1) * nLF, b:b + 1] = m
                if j + 1 < ns:
                    # Mask every occurrence of the current max (tie handling differs
                    # from torch.topk only on exact float ties).
                    vals = jnp.where(vals == m, neg_inf, vals)

    return kernel


def pacrr_plane_max_pooling(x, weights, biases, ns, block_batch=8):
    """x: [B, C, L, R]; weights[i]: [F, C, i+1, i+1]; biases[i]: [F]."""
    B, C, L, R = x.shape
    n_layers = len(weights)
    F = weights[0].shape[0]
    LR = L * R
    kmax = n_layers
    Ckk = C * kmax * kmax
    nLF = n_layers * F

    # Batch-block size (several batch elements per grid step).
    bt = min(B, block_batch)
    G = -(-B // bt)                       # cdiv
    B_pad = G * bt
    if G > 1 and (bt * LR) % 128 != 0:    # keep the lane block 128-aligned
        bt, G, B_pad = B, 1, B

    # --- single k_max im2col, K-major with batch on lanes: (Ckk, B_pad*LR) ------
    xp = jnp.pad(x, ((0, 0), (0, 0), (0, kmax - 1), (0, kmax - 1)))
    slabs = [xp[:, :, dl:dl + L, dr:dr + R]
             for dl in range(kmax) for dr in range(kmax)]        # each [B, C, L, R]
    P = jnp.stack(slabs, axis=2)                                 # [B, C, kmax^2, L, R]
    P = P.reshape(B, Ckk, LR).astype(jnp.float32)
    if B_pad != B:
        P = jnp.pad(P, ((0, B_pad - B), (0, 0), (0, 0)))
    P = jnp.transpose(P, (1, 0, 2)).reshape(Ckk, B_pad * LR)

    # --- stack zero-padded weights / biases across layers -----------------------
    w_rows = []
    for i, w in enumerate(weights):
        k = i + 1
        wp = jnp.pad(w.astype(jnp.float32),
                     ((0, 0), (0, 0), (0, kmax - k), (0, kmax - k)))
        w_rows.append(wp.reshape(F, Ckk))
    W_all = jnp.concatenate(w_rows, axis=0)                      # (nLF, Ckk)
    b_all = jnp.concatenate(
        [b.reshape(F, 1).astype(jnp.float32) for b in biases], axis=0)  # (nLF, 1)

    out = pl.pallas_call(
        _make_kernel(n_layers, F, LR, ns, bt),
        out_shape=jax.ShapeDtypeStruct((G, ns * nLF, bt), jnp.float32),
        grid_spec=pltpu.PrefetchScalarGridSpec(
            num_scalar_prefetch=0,
            grid=(G,),
            in_specs=[
                pl.BlockSpec((Ckk, bt * LR), lambda g: (0, g)),   # patch block
                pl.BlockSpec((nLF, Ckk), lambda g: (0, 0)),       # fused weights
                pl.BlockSpec((nLF, 1), lambda g: (0, 0)),         # fused biases
            ],
            out_specs=pl.BlockSpec((1, ns * nLF, bt), lambda g: (g, 0, 0)),
        ),
        compiler_params=pltpu.CompilerParams(
            dimension_semantics=("parallel",)),
    )(P, W_all, b_all)

    # out[g, j*nLF + i*F + f, lb]  ->  phi[b, i, j, f],  b = g*bt + lb
    phi = out.reshape(G, ns, n_layers, F, bt)
    phi = jnp.transpose(phi, (0, 4, 2, 1, 3)).reshape(B_pad, n_layers, ns, F)
    return phi[:B]


def reference(x, weights, biases, ns):
    """Pure-JAX reference of the PyTorch forward (for validation)."""
    B, C, L, R = x.shape
    outs = []
    for i, (w, b) in enumerate(zip(weights, biases)):
        xp = jnp.pad(x, ((0, 0), (0, 0), (0, i), (0, i)))
        z = lax.conv_general_dilated(
            xp, w, window_strides=(1, 1), padding="VALID",
            dimension_numbers=("NCHW", "OIHW", "NCHW"))
        z = jnp.tanh(z + b[None, :, None, None])
        y = z.reshape(B, w.shape[0], -1)
        outs.append(lax.top_k(y, ns)[0])                         # (B, F, ns)
    phi = jnp.stack(outs, axis=-1)                               # (B, F, ns, n_layers)
    return jnp.transpose(phi, (0, 3, 2, 1))                      # (B, n_layers, ns, F)


if __name__ == "__main__":
    B, C, L, R = 2, 4, 16, 16
    num_conv_layers = 3
    filters_count = 8
    ns = 4

    key = jax.random.PRNGKey(0)
    keys = jax.random.split(key, 1 + 2 * num_conv_layers)
    x = jax.random.normal(keys[0], (B, C, L, R), jnp.float32)

    weights, biases = [], []
    for i in range(num_conv_layers):
        k = i + 1
        bound = float(C * k * k) ** -0.5
        w = jax.random.uniform(keys[1 + 2 * i], (filters_count, C, k, k),
                               jnp.float32, -bound, bound)
        b = jax.random.uniform(keys[2 + 2 * i], (filters_count,),
                               jnp.float32, -bound, bound)
        weights.append(w)
        biases.append(b)

    phi = pacrr_plane_max_pooling(x, weights, biases, ns)
    phi = jax.block_until_ready(phi)

    ref = reference(x, weights, biases, ns)
    assert phi.shape == (B, num_conv_layers, ns, filters_count), phi.shape
    assert jnp.allclose(phi, ref, rtol=1e-5, atol=1e-5), "mismatch vs reference"

    print("KERNEL_OK")
</pallas_src>

<mosaic_0001>
module attributes {stable_mosaic.version = 11 : i64} {
  func.func @kernel(%arg0: i32, %arg1: memref<36x512xf32, #tpu.memory_space<vmem>>, %arg2: memref<24x36xf32, #tpu.memory_space<vmem>>, %arg3: memref<24x1xf32, #tpu.memory_space<vmem>>, %arg4: memref<1x96x2xf32, #tpu.memory_space<vmem>>) attributes {dimension_semantics = [#tpu.dimension_semantics<parallel>], iteration_bounds = array<i64: 1>, scalar_prefetch = 0 : i64, scratch_operands = 0 : i64, tpu.core_type = #tpu.core_type<tc>, window_params = [{transform_indices = @transform_0, window_bounds = array<i64: 36, 512>}, {pipeline_mode = #tpu.pipeline_mode<synchronous>, transform_indices = @transform_1, window_bounds = array<i64: 24, 36>}, {pipeline_mode = #tpu.pipeline_mode<synchronous>, transform_indices = @transform_2, window_bounds = array<i64: 24, 1>}, {transform_indices = @transform_3, window_bounds = array<i64: 1, 96, 2>}]} {
    %c0 = arith.constant 0 : index
    %c0_0 = arith.constant 0 : index
    %0 = vector.load %arg2[%c0, %c0_0] : memref<24x36xf32, #tpu.memory_space<vmem>>, vector<24x36xf32>
    %c0_1 = arith.constant 0 : index
    %c0_2 = arith.constant 0 : index
    %1 = vector.load %arg1[%c0_1, %c0_2] : memref<36x512xf32, #tpu.memory_space<vmem>>, vector<36x512xf32>
    %cst = arith.constant dense<0.000000e+00> : vector<24x512xf32>
    %2 = tpu.matmul %0, %1, %cst {dimension_numbers = #tpu.dot_dimension_numbers<[1], [0], [0], [1], [0, 0, 1, 1], [], []>} : vector<24x36xf32>, vector<36x512xf32>, vector<24x512xf32> -> vector<24x512xf32>
    %c0_3 = arith.constant 0 : index
    %c0_4 = arith.constant 0 : index
    %3 = vector.load %arg3[%c0_3, %c0_4] : memref<24x1xf32, #tpu.memory_space<vmem>>, vector<24x1xf32>
    %4 = vector.broadcast %3 : vector<24x1xf32> to vector<24x512xf32>
    %5 = arith.addf %2, %4 : vector<24x512xf32>
    %6 = math.tanh %5 : vector<24x512xf32>
    %7 = vector.extract_strided_slice %6 {offsets = [0, 0], sizes = [24, 256], strides = [1, 1]} : vector<24x512xf32> to vector<24x256xf32>
    %cst_5 = arith.constant dense<0xFF800000> : vector<24xf32>
    %8 = vector.multi_reduction <maximumf>, %7, %cst_5 [1] : vector<24x256xf32> to vector<24xf32>
    %9 = vector.shape_cast %8 : vector<24xf32> to vector<24x1xf32>
    %c0_6 = arith.constant 0 : index
    %c0_7 = arith.constant 0 : index
    %c0_8 = arith.constant 0 : index
    %10 = vector.load %arg4[%c0_6, %c0_7, %c0_8] : memref<1x96x2xf32, #tpu.memory_space<vmem>>, vector<1x24x1xf32>
    %11 = vector.shape_cast %10 : vector<1x24x1xf32> to vector<24x1xf32>
    %12 = vector.shape_cast %9 : vector<24x1xf32> to vector<1x24x1xf32>
    tpu.vector_store %arg4[%c0_6, %c0_7, %c0_8], %12 {strides = array<i32>} : memref<1x96x2xf32, #tpu.memory_space<vmem>>, vector<1x24x1xf32>,
    %13 = vector.broadcast %9 : vector<24x1xf32> to vector<24x256xf32>
    %14 = arith.cmpf oeq, %7, %13 : vector<24x256xf32>
    %cst_9 = arith.constant 0xFF800000 : f32
    %15 = vector.broadcast %cst_9 : f32 to vector<24x256xf32>
    %16 = arith.select %14, %15, %7 : vector<24x256xi1>, vector<24x256xf32>
    %cst_10 = arith.constant dense<0xFF800000> : vector<24xf32>
    %17 = vector.multi_reduction <maximumf>, %16, %cst_10 [1] : vector<24x256xf32> to vector<24xf32>
    %18 = vector.shape_cast %17 : vector<24xf32> to vector<24x1xf32>
    %c0_11 = arith.constant 0 : index
    %c24 = arith.constant 24 : index
    %c0_12 = arith.constant 0 : index
    %19 = vector.load %arg4[%c0_11, %c24, %c0_12] : memref<1x96x2xf32, #tpu.memory_space<vmem>>, vector<1x24x1xf32>
    %20 = vector.shape_cast %19 : vector<1x24x1xf32> to vector<24x1xf32>
    %21 = vector.shape_cast %18 : vector<24x1xf32> to vector<1x24x1xf32>
    tpu.vector_store %arg4[%c0_11, %c24, %c0_12], %21 {strides = array<i32>} : memref<1x96x2xf32, #tpu.memory_space<vmem>>, vector<1x24x1xf32>,
    %22 = vector.broadcast %18 : vector<24x1xf32> to vector<24x256xf32>
    %23 = arith.cmpf oeq, %16, %22 : vector<24x256xf32>
    %cst_13 = arith.constant 0xFF800000 : f32
    %24 = vector.broadcast %cst_13 : f32 to vector<24x256xf32>
    %25 = arith.select %23, %24, %16 : vector<24x256xi1>, vector<24x256xf32>
    %cst_14 = arith.constant dense<0xFF800000> : vector<24xf32>
    %26 = vector.multi_reduction <maximumf>, %25, %cst_14 [1] : vector<24x256xf32> to vector<24xf32>
    %27 = vector.shape_cast %26 : vector<24xf32> to vector<24x1xf32>
    %c0_15 = arith.constant 0 : index
    %c48 = arith.constant 48 : index
    %c0_16 = arith.constant 0 : index
    %28 = vector.load %arg4[%c0_15, %c48, %c0_16] : memref<1x96x2xf32, #tpu.memory_space<vmem>>, vector<1x24x1xf32>
    %29 = vector.shape_cast %28 : vector<1x24x1xf32> to vector<24x1xf32>
    %30 = vector.shape_cast %27 : vector<24x1xf32> to vector<1x24x1xf32>
    tpu.vector_store %arg4[%c0_15, %c48, %c0_16], %30 {strides = array<i32>} : memref<1x96x2xf32, #tpu.memory_space<vmem>>, vector<1x24x1xf32>,
    %31 = vector.broadcast %27 : vector<24x1xf32> to vector<24x256xf32>
    %32 = arith.cmpf oeq, %25, %31 : vector<24x256xf32>
    %cst_17 = arith.constant 0xFF800000 : f32
    %33 = vector.broadcast %cst_17 : f32 to vector<24x256xf32>
    %34 = arith.select %32, %33, %25 : vector<24x256xi1>, vector<24x256xf32>
    %cst_18 = arith.constant dense<0xFF800000> : vector<24xf32>
    %35 = vector.multi_reduction <maximumf>, %34, %cst_18 [1] : vector<24x256xf32> to vector<24xf32>
    %36 = vector.shape_cast %35 : vector<24xf32> to vector<24x1xf32>
    %c0_19 = arith.constant 0 : index
    %c72 = arith.constant 72 : index
    %c0_20 = arith.constant 0 : index
    %37 = vector.load %arg4[%c0_19, %c72, %c0_20] : memref<1x96x2xf32, #tpu.memory_space<vmem>>, vector<1x24x1xf32>
    %38 = vector.shape_cast %37 : vector<1x24x1xf32> to vector<24x1xf32>
    %39 = vector.shape_cast %36 : vector<24x1xf32> to vector<1x24x1xf32>
    tpu.vector_store %arg4[%c0_19, %c72, %c0_20], %39 {strides = array<i32>} : memref<1x96x2xf32, #tpu.memory_space<vmem>>, vector<1x24x1xf32>,
    %40 = vector.extract_strided_slice %6 {offsets = [0, 256], sizes = [24, 256], strides = [1, 1]} : vector<24x512xf32> to vector<24x256xf32>
    %cst_21 = arith.constant dense<0xFF800000> : vector<24xf32>
    %41 = vector.multi_reduction <maximumf>, %40, %cst_21 [1] : vector<24x256xf32> to vector<24xf32>
    %42 = vector.shape_cast %41 : vector<24xf32> to vector<24x1xf32>
    %c0_22 = arith.constant 0 : index
    %c0_23 = arith.constant 0 : index
    %c1 = arith.constant 1 : index
    %43 = vector.load %arg4[%c0_22, %c0_23, %c1] : memref<1x96x2xf32, #tpu.memory_space<vmem>>, vector<1x24x1xf32>
    %44 = vector.shape_cast %43 : vector<1x24x1xf32> to vector<24x1xf32>
    %45 = vector.shape_cast %42 : vector<24x1xf32> to vector<1x24x1xf32>
    tpu.vector_store %arg4[%c0_22, %c0_23, %c1], %45 {strides = array<i32>} : memref<1x96x2xf32, #tpu.memory_space<vmem>>, vector<1x24x1xf32>,
    %46 = vector.broadcast %42 : vector<24x1xf32> to vector<24x256xf32>
    %47 = arith.cmpf oeq, %40, %46 : vector<24x256xf32>
    %cst_24 = arith.constant 0xFF800000 : f32
    %48 = vector.broadcast %cst_24 : f32 to vector<24x256xf32>
    %49 = arith.select %47, %48, %40 : vector<24x256xi1>, vector<24x256xf32>
    %cst_25 = arith.constant dense<0xFF800000> : vector<24xf32>
    %50 = vector.multi_reduction <maximumf>, %49, %cst_25 [1] : vector<24x256xf32> to vector<24xf32>
    %51 = vector.shape_cast %50 : vector<24xf32> to vector<24x1xf32>
    %c0_26 = arith.constant 0 : index
    %c24_27 = arith.constant 24 : index
    %c1_28 = arith.constant 1 : index
    %52 = vector.load %arg4[%c0_26, %c24_27, %c1_28] : memref<1x96x2xf32, #tpu.memory_space<vmem>>, vector<1x24x1xf32>
    %53 = vector.shape_cast %52 : vector<1x24x1xf32> to vector<24x1xf32>
    %54 = vector.shape_cast %51 : vector<24x1xf32> to vector<1x24x1xf32>
    tpu.vector_store %arg4[%c0_26, %c24_27, %c1_28], %54 {strides = array<i32>} : memref<1x96x2xf32, #tpu.memory_space<vmem>>, vector<1x24x1xf32>,
    %55 = vector.broadcast %51 : vector<24x1xf32> to vector<24x256xf32>
    %56 = arith.cmpf oeq, %49, %55 : vector<24x256xf32>
    %cst_29 = arith.constant 0xFF800000 : f32
    %57 = vector.broadcast %cst_29 : f32 to vector<24x256xf32>
    %58 = arith.select %56, %57, %49 : vector<24x256xi1>, vector<24x256xf32>
    %cst_30 = arith.constant dense<0xFF800000> : vector<24xf32>
    %59 = vector.multi_reduction <maximumf>, %58, %cst_30 [1] : vector<24x256xf32> to vector<24xf32>
    %60 = vector.shape_cast %59 : vector<24xf32> to vector<24x1xf32>
    %c0_31 = arith.constant 0 : index
    %c48_32 = arith.constant 48 : index
    %c1_33 = arith.constant 1 : index
    %61 = vector.load %arg4[%c0_31, %c48_32, %c1_33] : memref<1x96x2xf32, #tpu.memory_space<vmem>>, vector<1x24x1xf32>
    %62 = vector.shape_cast %61 : vector<1x24x1xf32> to vector<24x1xf32>
    %63 = vector.shape_cast %60 : vector<24x1xf32> to vector<1x24x1xf32>
    tpu.vector_store %arg4[%c0_31, %c48_32, %c1_33], %63 {strides = array<i32>} : memref<1x96x2xf32, #tpu.memory_space<vmem>>, vector<1x24x1xf32>,
    %64 = vector.broadcast %60 : vector<24x1xf32> to vector<24x256xf32>
    %65 = arith.cmpf oeq, %58, %64 : vector<24x256xf32>
    %cst_34 = arith.constant 0xFF800000 : f32
    %66 = vector.broadcast %cst_34 : f32 to vector<24x256xf32>
    %67 = arith.select %65, %66, %58 : vector<24x256xi1>, vector<24x256xf32>
    %cst_35 = arith.constant dense<0xFF800000> : vector<24xf32>
    %68 = vector.multi_reduction <maximumf>, %67, %cst_35 [1] : vector<24x256xf32> to vector<24xf32>
    %69 = vector.shape_cast %68 : vector<24xf32> to vector<24x1xf32>
    %c0_36 = arith.constant 0 : index
    %c72_37 = arith.constant 72 : index
    %c1_38 = arith.constant 1 : index
    %70 = vector.load %arg4[%c0_36, %c72_37, %c1_38] : memref<1x96x2xf32, #tpu.memory_space<vmem>>, vector<1x24x1xf32>
    %71 = vector.shape_cast %70 : vector<1x24x1xf32> to vector<24x1xf32>
    %72 = vector.shape_cast %69 : vector<24x1xf32> to vector<1x24x1xf32>
    tpu.vector_store %arg4[%c0_36, %c72_37, %c1_38], %72 {strides = array<i32>} : memref<1x96x2xf32, #tpu.memory_space<vmem>>, vector<1x24x1xf32>,
    return
  }
  func.func @transform_0(%arg0: i32) -> (i32, i32) {
    %c0_i32 = arith.constant 0 : i32
    %c0_i32_0 = arith.constant 0 : i32
    return %c0_i32, %arg0 : i32, i32
  }
  func.func @transform_1(%arg0: i32) -> (i32, i32) {
    %c0_i32 = arith.constant 0 : i32
    %c0_i32_0 = arith.constant 0 : i32
    %c0_i32_1 = arith.constant 0 : i32
    return %c0_i32, %c0_i32_0 : i32, i32
  }
  func.func @transform_2(%arg0: i32) -> (i32, i32) {
    %c0_i32 = arith.constant 0 : i32
    %c0_i32_0 = arith.constant 0 : i32
    %c0_i32_1 = arith.constant 0 : i32
    return %c0_i32, %c0_i32_0 : i32, i32
  }
  func.func @transform_3(%arg0: i32) -> (i32, i32, i32) {
    %c0_i32 = arith.constant 0 : i32
    %c0_i32_0 = arith.constant 0 : i32
    %c0_i32_1 = arith.constant 0 : i32
    return %arg0, %c0_i32, %c0_i32_0 : i32, i32, i32
  }
}

</mosaic_0001>

<llo_original>
// kernel: tpu_custom_call.1
$region0: #{tpu_custom_call.1}
  #allocation0 [shape = 'u32[]', space=smem, size = 0x4, offset = 0x4, fixed_abs, tag = 'smem constant byte address 0x4 - core index']
  #allocation1 [shape = 'u32[144,128]{1,0:T(1,128)}', space=vmem, size = 0x12000, scoped, tag = 'internal scratch']
  %s0 = inlined_call_operand.hbm [shape: f32[36,512], index: 0, kind: input, shape index: {}]
  %s1 = inlined_call_operand.vmem [shape: f32[24,36], index: 1, kind: input, shape index: {}]
  %s2 = inlined_call_operand.vmem [shape: f32[24,1], index: 2, kind: input, shape index: {}]
  %s3 = inlined_call_operand.vmem [shape: f32[1,96,2], index: 3, kind: output, shape index: {}]
  %s4 = sld [smem:[#allocation0]]
  $region26: #{tpu_custom_call.1} parent=0
    _
  %s6 = ssub.s32 1, %s4
  %s7 = scalar_select 0, %s6, %s4
  $region1: #{tpu_custom_call.1} parent=0
    #allocation2 [shape = 'u8[81920]{0}', space=vmem, size = 0x14000, scoped, tag = 'input window, operand 0, single buffered']
    #allocation3 [shape = 's32[1]{0}', space=sflag, size = 0x4, scoped, tag = 'scoped memory for tpu_custom_call.1']
    %8 = vsyncpa [#allocation3], 0
    // Predicated region
    $region2: #{tpu_custom_call.1} parent=1 // pred_check
      _
    $region3: #{tpu_custom_call.1} parent=1 // pred_check_branch
      %10 = sbr.rel (0) target = $region5
    $region4: #{tpu_custom_call.1} parent=1 // pred_region
      %s12 = ssub.s32 2560, 2560
      %13 = vsyncadd [#allocation3], %s12
      %s14 = sshll.u32 [#allocation2], 4
      %s15 = int_to_ptr.vmem [resolvable:$true] %s14
      %20 = dma.hbm_to_vmem [thread:$0]  %s0, 2560, %s15, [#allocation3], 512, 512, 32
    $region5: #{tpu_custom_call.1} parent=1 // pred_fallthru
      _
    // Predicated region
    $region6: #{tpu_custom_call.1} parent=1 // pred_check
      _
    $region7: #{tpu_custom_call.1} parent=1 // pred_check_branch
      %22 = sbr.rel (0) target = $region9
    $region8: #{tpu_custom_call.1} parent=1 // pred_region
      _
    $region9: #{tpu_custom_call.1} parent=1 // pred_fallthru
      _
    // Predicated region
    $region10: #{tpu_custom_call.1} parent=1 // pred_check
      _
    $region11: #{tpu_custom_call.1} parent=1 // pred_check_branch
      %24 = sbr.rel (0) target = $region13
    $region12: #{tpu_custom_call.1} parent=1 // pred_region
      _
    $region13: #{tpu_custom_call.1} parent=1 // pred_fallthru
      _
    // Predicated region
    $region14: #{tpu_custom_call.1} parent=1 // pred_check
      _
    $region15: #{tpu_custom_call.1} parent=1 // pred_check_branch
      %26 = sbr.rel (0) target = $region17
    $region16: #{tpu_custom_call.1} parent=1 // pred_region
      %27 = dma.done [#allocation3], 2560
    $region17: #{tpu_custom_call.1} parent=1 // pred_fallthru
      _
    %v28 = vld [vmem:[%s1] sm:$0xff]
    %v29 = vld [vmem:[%s1 + $0x8] sm:$0xff]
    %v30 = vld [vmem:[%s1 + $0x10] sm:$0xff]
    %v31 = vld [vmem:[#allocation2] sm:$0xff]
    %v32 = vld [vmem:[#allocation2 + $0x8] sm:$0xff]
    %v33 = vld [vmem:[#allocation2 + $0x10] sm:$0xff]
    %v34 = vld [vmem:[#allocation2 + $0x18] sm:$0xff]
    %v35 = vld [vmem:[#allocation2 + $0x20] sm:$0xff]
    %v36 = vld [vmem:[#allocation2 + $0x28] sm:$0xff]
    %v37 = vld [vmem:[#allocation2 + $0x30] sm:$0xff]
    %v38 = vld [vmem:[#allocation2 + $0x38] sm:$0xff]
    %v39 = vld [vmem:[#allocation2 + $0x40] sm:$0xff]
    %v40 = vld [vmem:[#allocation2 + $0x48] sm:$0xff]
    %v41 = vld [vmem:[#allocation2 + $0x50] sm:$0xff]
    %v42 = vld [vmem:[#allocation2 + $0x58] sm:$0xff]
    %v43 = vld [vmem:[#allocation2 + $0x60] sm:$0xff]
    %v44 = vld [vmem:[#allocation2 + $0x68] sm:$0xff]
    %v45 = vld [vmem:[#allocation2 + $0x70] sm:$0xff]
    %v46 = vld [vmem:[#allocation2 + $0x78] sm:$0xff]
    %v47 = vld [vmem:[#allocation2 + $0x80] sm:$0xf]
    %v48 = vld [vmem:[#allocation2 + $0x88] sm:$0xf]
    %v49 = vld [vmem:[#allocation2 + $0x90] sm:$0xf]
    %v50 = vld [vmem:[#allocation2 + $0x98] sm:$0xf]
    %v51 = vld [vmem:[%s2] sm:$0xff]
    %v52 = vld [vmem:[%s2 + $0x8] sm:$0xff]
    %v53 = vld [vmem:[%s2 + $0x10] sm:$0xff]
    %55 = vset.pattern.permute.xlu0 0
    %56 = vperm.xlu0 %55, %v51
    %v57 = vpop.permute.xlu0 %56
    %60 = vset.pattern.permute.xlu0 0
    %61 = vperm.xlu0 %60, %v52
    %v62 = vpop.permute.xlu0 %61
    %65 = vset.pattern.permute.xlu0 0
    %66 = vperm.xlu0 %65, %v53
    %v67 = vpop.permute.xlu0 %66
    %vm69 = vcmask 293888
    %v71 = vsel %vm69, %v28, 0
    %v74 = vsel %vm69, %v29, 0
    %v77 = vsel %vm69, %v30, 0
    %vm79 = vcmask 1043456
    %v81 = vsel %vm79, %v47, 0
    %v84 = vsel %vm79, %v48, 0
    %v87 = vsel %vm79, %v49, 0
    %v90 = vsel %vm79, %v50, 0
    %92 = vmatprep.subr.mxu0 %v32
    %93 = vmatpush1.msra.mxu0 %v31
    %94 = vmatprep.subr.mxu0 %v36
    %95 = vmatpush1.msra.mxu0 %v35
    %96 = vmatprep.subr.mxu0 %v40
    %97 = vmatpush1.msra.mxu0 %v39
    %98 = vmatprep.subr.mxu0 %v44
    %99 = vmatpush1.msra.mxu0 %v43
    %100 = vmatprep.subr.mxu0 %v84
    %101 = vmatpush1.msra.mxu0 %v81
    %102 = vmatprep.subr.mxu0 0.0
    %103 = vmatpush1.msra.mxu0 0.0
    %104 = vmatprep.subr.mxu0 0.0
    %105 = vmatpush1.msra.mxu0 0.0
    %106 = vmatprep.subr.mxu0 0.0
    %107 = vmatpush1.msra.mxu0 0.0
    %108 = vmatprep.subr.mxu0 0.0
    %109 = vmatpush1.msra.mxu0 0.0
    %110 = vmatprep.subr.mxu0 0.0
    %111 = vmatpush1.msra.mxu0 0.0
    %112 = vmatprep.subr.mxu0 0.0
    %113 = vmatpush1.msra.mxu0 0.0
    %114 = vmatprep.subr.mxu0 0.0
    %115 = vmatpush1.msra.mxu0 0.0
    %116 = vmatprep.subr.mxu0 0.0
    %117 = vmatpush1.msra.mxu0 0.0
    %118 = vmatprep.subr.mxu0 0.0
    %119 = vmatpush1.msra.mxu0 0.0
    %120 = vmatprep.subr.mxu0 0.0
    %121 = vmatpush1.msra.mxu0 0.0
    %122 = vmatprep.subr.mxu0 0.0
    %123 = vmatpush1.msra.mxu0 0.0
    %124 = vmatprep.subr.mxu0 0.0
    %125 = vmatpush1.msra.mxu0 0.0
    %126 = vmatprep.subr.mxu0 0.0
    %127 = vmatpush1.msra.mxu0 0.0
    %128 = vmatprep.subr.mxu0 0.0
    %129 = vmatpush1.msra.mxu0 0.0
    %130 = vmatprep.subr.mxu0 0.0
    %131 = vmatpush1.msra.mxu0 0.0
    %132 = vmatprep.subr.mxu0 0.0
    %133 = vmatpush1.msra.mxu0 0.0
    %134 = vmatprep.subr.mxu0 0.0
    %135 = vmatpush1.msra.mxu0 0.0
    %136 = vmatprep.subr.mxu0 0.0
    %137 = vmatpush1.msra.mxu0 0.0
    %138 = vmatprep.subr.mxu0 0.0
    %139 = vmatpush1.msra.mxu0 0.0
    %140 = vmatprep.subr.mxu0 0.0
    %141 = vmatpush1.msra.mxu0 0.0
    %142 = vmatprep.subr.mxu0 0.0
    %143 = vmatpush1.msra.mxu0 0.0
    %144 = vmatprep.subr.mxu0 0.0
    %145 = vmatpush1.msra.mxu0 0.0
    %146 = vmatprep.subr.mxu0 0.0
    %147 = vmatpush1.msra.mxu0 0.0
    %148 = vmatprep.subr.mxu0 0.0
    %149 = vmatpush1.msra.mxu0 0.0
    %150 = vmatprep.subr.mxu0 0.0
    %151 = vmatpush1.msra.mxu0 0.0
    %152 = vmatprep.subr.mxu0 0.0
    %153 = vmatpush1.msra.mxu0 0.0
    %154 = vmatprep.subr.mxu0 0.0
    %155 = vmatpush1.msra.mxu0 0.0
    %156 = vmatprep.mubr.f32.mxu0 0.0
    %157 = vmatmul.mubr.f32.gmra.mrb[0].mxu0 %v71
    %v158 = vpop.f32.mrb[0].mxu0
    %v159 = vadd.f32 %v57, %v158
    %v160 = vpop.f32.mrb[0].mxu0
    %v161 = vadd.f32 %v57, %v160
    %162 = vmatprep.mubr.f32.mxu0 0.0
    %163 = vmatmul.mubr.f32.gmra.mrb[0].mxu0 %v74
    %v164 = vpop.f32.mrb[0].mxu0
    %v165 = vadd.f32 %v62, %v164
    %v166 = vpop.f32.mrb[0].mxu0
    %v167 = vadd.f32 %v62, %v166
    %168 = vmatprep.mubr.f32.mxu0 0.0
    %169 = vmatmul.mubr.f32.gmra.mrb[0].mxu0 %v77
    %v170 = vpop.f32.mrb[0].mxu0
    %v171 = vadd.f32 %v67, %v170
    %v172 = vpop.f32.mrb[0].mxu0
    %v173 = vadd.f32 %v67, %v172
    %174 = vdwg.mxu0
    %175 = vmatprep.subr.mxu0 %v34
    %176 = vmatpush1.msra.mxu0 %v33
    %177 = vmatprep.subr.mxu0 %v38
    %178 = vmatpush1.msra.mxu0 %v37
    %179 = vmatprep.subr.mxu0 %v42
    %180 = vmatpush1.msra.mxu0 %v41
    %181 = vmatprep.subr.mxu0 %v46
    %182 = vmatpush1.msra.mxu0 %v45
    %183 = vmatprep.subr.mxu0 %v90
    %184 = vmatpush1.msra.mxu0 %v87
    %185 = vmatprep.subr.mxu0 0.0
    %186 = vmatpush1.msra.mxu0 0.0
    %187 = vmatprep.subr.mxu0 0.0
    %188 = vmatpush1.msra.mxu0 0.0
    %189 = vmatprep.subr.mxu0 0.0
    %190 = vmatpush1.msra.mxu0 0.0
    %191 = vmatprep.subr.mxu0 0.0
    %192 = vmatpush1.msra.mxu0 0.0
    %193 = vmatprep.subr.mxu0 0.0
    %194 = vmatpush1.msra.mxu0 0.0
    %195 = vmatprep.subr.mxu0 0.0
    %196 = vmatpush1.msra.mxu0 0.0
    %197 = vmatprep.subr.mxu0 0.0
    %198 = vmatpush1.msra.mxu0 0.0
    %199 = vmatprep.subr.mxu0 0.0
    %200 = vmatpush1.msra.mxu0 0.0
    %201 = vmatprep.subr.mxu0 0.0
    %202 = vmatpush1.msra.mxu0 0.0
    %203 = vmatprep.subr.mxu0 0.0
    %204 = vmatpush1.msra.mxu0 0.0
    %205 = vmatprep.subr.mxu0 0.0
    %206 = vmatpush1.msra.mxu0 0.0
    %207 = vmatprep.subr.mxu0 0.0
    %208 = vmatpush1.msra.mxu0 0.0
    %209 = vmatprep.subr.mxu0 0.0
    %210 = vmatpush1.msra.mxu0 0.0
    %211 = vmatprep.subr.mxu0 0.0
    %212 = vmatpush1.msra.mxu0 0.0
    %213 = vmatprep.subr.mxu0 0.0
    %214 = vmatpush1.msra.mxu0 0.0
    %215 = vmatprep.subr.mxu0 0.0
    %216 = vmatpush1.msra.mxu0 0.0
    %217 = vmatprep.subr.mxu0 0.0
    %218 = vmatpush1.msra.mxu0 0.0
    %219 = vmatprep.subr.mxu0 0.0
    %220 = vmatpush1.msra.mxu0 0.0
    %221 = vmatprep.subr.mxu0 0.0
    %222 = vmatpush1.msra.mxu0 0.0
    %223 = vmatprep.subr.mxu0 0.0
    %224 = vmatpush1.msra.mxu0 0.0
    %225 = vmatprep.subr.mxu0 0.0
    %226 = vmatpush1.msra.mxu0 0.0
    %227 = vmatprep.subr.mxu0 0.0
    %228 = vmatpush1.msra.mxu0 0.0
    %229 = vmatprep.subr.mxu0 0.0
    %230 = vmatpush1.msra.mxu0 0.0
    %231 = vmatprep.subr.mxu0 0.0
    %232 = vmatpush1.msra.mxu0 0.0
    %233 = vmatprep.subr.mxu0 0.0
    %234 = vmatpush1.msra.mxu0 0.0
    %235 = vmatprep.subr.mxu0 0.0
    %236 = vmatpush1.msra.mxu0 0.0
    %237 = vmatprep.subr.mxu0 0.0
    %238 = vmatpush1.msra.mxu0 0.0
    %239 = vmatprep.mubr.f32.mxu0 0.0
    %240 = vmatmul.mubr.f32.gmra.mrb[0].mxu0 %v71
    %v241 = vpop.f32.mrb[0].mxu0
    %v242 = vadd.f32 %v57, %v241
    %v243 = vpop.f32.mrb[0].mxu0
    %v244 = vadd.f32 %v57, %v243
    %245 = vmatprep.mubr.f32.mxu0 0.0
    %246 = vmatmul.mubr.f32.gmra.mrb[0].mxu0 %v74
    %v247 = vpop.f32.mrb[0].mxu0
    %v248 = vadd.f32 %v62, %v247
    %v249 = vpop.f32.mrb[0].mxu0
    %v250 = vadd.f32 %v62, %v249
    %251 = vmatprep.mubr.f32.mxu0 0.0
    %252 = vmatmul.mubr.f32.gmra.mrb[0].mxu0 %v77
    %v253 = vpop.f32.mrb[0].mxu0
    %v254 = vadd.f32 %v67, %v253
    %v255 = vpop.f32.mrb[0].mxu0
    %v256 = vadd.f32 %v67, %v255
    %257 = vdwg.mxu0
    %v258 = vtanh.pop %v159
    %v259 = vtanh.pop %v161
    %v260 = vtanh.pop %v242
    %v261 = vtanh.pop %v244
    %v262 = vtanh.pop %v165
    %v263 = vtanh.pop %v167
    %v264 = vtanh.pop %v248
    %v265 = vtanh.pop %v250
    %v266 = vtanh.pop %v171
    %v267 = vtanh.pop %v173
    %v268 = vtanh.pop %v254
    %v269 = vtanh.pop %v256
    %v270 = vmax.f32 %v258, %v259
    %271 = vmax.xlane.f32.xlu0 %v270
    %v272 = vpop.xlane.xlu0 %271
    %v273 = vmax.f32 %v262, %v263
    %274 = vmax.xlane.f32.xlu0 %v273
    %v275 = vpop.xlane.xlu0 %274
    %v276 = vmax.f32 %v266, %v267
    %277 = vmax.xlane.f32.xlu0 %v276
    %v278 = vpop.xlane.xlu0 %277
    %vm279 = vcmask 7168
    %280 = vst.msk [vmem:[%s3] sm:$0xff] %vm279, %v272
    %281 = vst.msk [vmem:[%s3 + $0x8] sm:$0xff] %vm279, %v275
    %282 = vst.msk [vmem:[%s3 + $0x10] sm:$0xff] %vm279, %v278
    %vm283 = vcmp.eq.f32.partialorder %v258, %v272
    %vm284 = vcmp.eq.f32.partialorder %v259, %v272
    %vm285 = vcmp.eq.f32.partialorder %v262, %v275
    %vm286 = vcmp.eq.f32.partialorder %v263, %v275
    %vm287 = vcmp.eq.f32.partialorder %v266, %v278
    %vm288 = vcmp.eq.f32.partialorder %v267, %v278
    %v289 = vsel %vm283, -inf, %v258
    %v290 = vsel %vm284, -inf, %v259
    %v291 = vsel %vm285, -inf, %v262
    %v292 = vsel %vm286, -inf, %v263
    %v293 = vsel %vm287, -inf, %v266
    %v294 = vsel %vm288, -inf, %v267
    %v295 = vmax.f32 %v289, %v290
    %296 = vmax.xlane.f32.xlu0 %v295
    %v297 = vpop.xlane.xlu0 %296
    %v298 = vmax.f32 %v291, %v292
    %299 = vmax.xlane.f32.xlu0 %v298
    %v300 = vpop.xlane.xlu0 %299
    %v301 = vmax.f32 %v293, %v294
    %302 = vmax.xlane.f32.xlu0 %v301
    %v303 = vpop.xlane.xlu0 %302
    %304 = vst.msk [vmem:[%s3 + $0x18] sm:$0xff] %vm279, %v297
    %305 = vst.msk [vmem:[%s3 + $0x20] sm:$0xff] %vm279, %v300
    %306 = vst.msk [vmem:[%s3 + $0x28] sm:$0xff] %vm279, %v303
    %vm307 = vcmp.eq.f32.partialorder %v289, %v297
    %vm308 = vcmp.eq.f32.partialorder %v290, %v297
    %vm309 = vcmp.eq.f32.partialorder %v291, %v300
    %vm310 = vcmp.eq.f32.partialorder %v292, %v300
    %vm311 = vcmp.eq.f32.partialorder %v293, %v303
    %vm312 = vcmp.eq.f32.partialorder %v294, %v303
    %v313 = vsel %vm307, -inf, %v289
    %v314 = vsel %vm308, -inf, %v290
    %v315 = vsel %vm309, -inf, %v291
    %v316 = vsel %vm310, -inf, %v292
    %v317 = vsel %vm311, -inf, %v293
    %v318 = vsel %vm312, -inf, %v294
    %v319 = vmax.f32 %v313, %v314
    %320 = vmax.xlane.f32.xlu0 %v319
    %v321 = vpop.xlane.xlu0 %320
    %v322 = vmax.f32 %v315, %v316
    %323 = vmax.xlane.f32.xlu0 %v322
    %v324 = vpop.xlane.xlu0 %323
    %v325 = vmax.f32 %v317, %v318
    %326 = vmax.xlane.f32.xlu0 %v325
    %v327 = vpop.xlane.xlu0 %326
    %328 = vst.msk [vmem:[%s3 + $0x30] sm:$0xff] %vm279, %v321
    %329 = vst.msk [vmem:[%s3 + $0x38] sm:$0xff] %vm279, %v324
    %330 = vst.msk [vmem:[%s3 + $0x40] sm:$0xff] %vm279, %v327
    %vm331 = vcmp.eq.f32.partialorder %v313, %v321
    %vm332 = vcmp.eq.f32.partialorder %v314, %v321
    %vm333 = vcmp.eq.f32.partialorder %v315, %v324
    %vm334 = vcmp.eq.f32.partialorder %v316, %v324
    %vm335 = vcmp.eq.f32.partialorder %v317, %v327
    %vm336 = vcmp.eq.f32.partialorder %v318, %v327
    %v337 = vsel %vm331, -inf, %v313
    %v338 = vsel %vm332, -inf, %v314
    %v339 = vsel %vm333, -inf, %v315
    %v340 = vsel %vm334, -inf, %v316
    %v341 = vsel %vm335, -inf, %v317
    %v342 = vsel %vm336, -inf, %v318
    %v343 = vmax.f32 %v337, %v338
    %344 = vmax.xlane.f32.xlu0 %v343
    %v345 = vpop.xlane.xlu0 %344
    %v346 = vmax.f32 %v339, %v340
    %347 = vmax.xlane.f32.xlu0 %v346
    %v348 = vpop.xlane.xlu0 %347
    %v349 = vmax.f32 %v341, %v342
    %350 = vmax.xlane.f32.xlu0 %v349
    %v351 = vpop.xlane.xlu0 %350
    %352 = vst.msk [vmem:[%s3 + $0x48] sm:$0xff] %vm279, %v345
    %353 = vst.msk [vmem:[%s3 + $0x50] sm:$0xff] %vm279, %v348
    %354 = vst.msk [vmem:[%s3 + $0x58] sm:$0xff] %vm279, %v351
    %v355 = vmax.f32 %v260, %v261
    %356 = vmax.xlane.f32.xlu0 %v355
    %v357 = vpop.xlane.xlu0 %356
    %v358 = vmax.f32 %v264, %v265
    %359 = vmax.xlane.f32.xlu0 %v358
    %v360 = vpop.xlane.xlu0 %359
    %v361 = vmax.f32 %v268, %v269
    %362 = vmax.xlane.f32.xlu0 %v361
    %v363 = vpop.xlane.xlu0 %362
    %vm364 = vcmask 15368
    %365 = vst.msk [vmem:[%s3] sm:$0xff] %vm364, %v357
    %366 = vst.msk [vmem:[%s3 + $0x8] sm:$0xff] %vm364, %v360
    %367 = vst.msk [vmem:[%s3 + $0x10] sm:$0xff] %vm364, %v363
    %vm368 = vcmp.eq.f32.partialorder %v260, %v357
    %vm369 = vcmp.eq.f32.partialorder %v261, %v357
    %vm370 = vcmp.eq.f32.partialorder %v264, %v360
    %vm371 = vcmp.eq.f32.partialorder %v265, %v360
    %vm372 = vcmp.eq.f32.partialorder %v268, %v363
    %vm373 = vcmp.eq.f32.partialorder %v269, %v363
    %v374 = vsel %vm368, -inf, %v260
    %v375 = vsel %vm369, -inf, %v261
    %v376 = vsel %vm370, -inf, %v264
    %v377 = vsel %vm371, -inf, %v265
    %v378 = vsel %vm372, -inf, %v268
    %v379 = vsel %vm373, -inf, %v269
    %v380 = vmax.f32 %v374, %v375
    %381 = vmax.xlane.f32.xlu0 %v380
    %v382 = vpop.xlane.xlu0 %381
    %v383 = vmax.f32 %v376, %v377
    %384 = vmax.xlane.f32.xlu0 %v383
    %v385 = vpop.xlane.xlu0 %384
    %v386 = vmax.f32 %v378, %v379
    %387 = vmax.xlane.f32.xlu0 %v386
    %v388 = vpop.xlane.xlu0 %387
    %389 = vst.msk [vmem:[%s3 + $0x18] sm:$0xff] %vm364, %v382
    %390 = vst.msk [vmem:[%s3 + $0x20] sm:$0xff] %vm364, %v385
    %391 = vst.msk [vmem:[%s3 + $0x28] sm:$0xff] %vm364, %v388
    %vm392 = vcmp.eq.f32.partialorder %v374, %v382
    %vm393 = vcmp.eq.f32.partialorder %v375, %v382
    %vm394 = vcmp.eq.f32.partialorder %v376, %v385
    %vm395 = vcmp.eq.f32.partialorder %v377, %v385
    %vm396 = vcmp.eq.f32.partialorder %v378, %v388
    %vm397 = vcmp.eq.f32.partialorder %v379, %v388
    %v398 = vsel %vm392, -inf, %v374
    %v399 = vsel %vm393, -inf, %v375
    %v400 = vsel %vm394, -inf, %v376
    %v401 = vsel %vm395, -inf, %v377
    %v402 = vsel %vm396, -inf, %v378
    %v403 = vsel %vm397, -inf, %v379
    %v404 = vmax.f32 %v398, %v399
    %405 = vmax.xlane.f32.xlu0 %v404
    %v406 = vpop.xlane.xlu0 %405
    %v407 = vmax.f32 %v400, %v401
    %408 = vmax.xlane.f32.xlu0 %v407
    %v409 = vpop.xlane.xlu0 %408
    %v410 = vmax.f32 %v402, %v403
    %411 = vmax.xlane.f32.xlu0 %v410
    %v412 = vpop.xlane.xlu0 %411
    %413 = vst.msk [vmem:[%s3 + $0x30] sm:$0xff] %vm364, %v406
    %414 = vst.msk [vmem:[%s3 + $0x38] sm:$0xff] %vm364, %v409
    %415 = vst.msk [vmem:[%s3 + $0x40] sm:$0xff] %vm364, %v412
    %vm416 = vcmp.eq.f32.partialorder %v398, %v406
    %vm417 = vcmp.eq.f32.partialorder %v399, %v406
    %vm418 = vcmp.eq.f32.partialorder %v400, %v409
    %vm419 = vcmp.eq.f32.partialorder %v401, %v409
    %vm420 = vcmp.eq.f32.partialorder %v402, %v412
    %vm421 = vcmp.eq.f32.partialorder %v403, %v412
    %v422 = vsel %vm416, -inf, %v398
    %v423 = vsel %vm417, -inf, %v399
    %v424 = vsel %vm418, -inf, %v400
    %v425 = vsel %vm419, -inf, %v401
    %v426 = vsel %vm420, -inf, %v402
    %v427 = vsel %vm421, -inf, %v403
    %v428 = vmax.f32 %v422, %v423
    %429 = vmax.xlane.f32.xlu0 %v428
    %v430 = vpop.xlane.xlu0 %429
    %v431 = vmax.f32 %v424, %v425
    %432 = vmax.xlane.f32.xlu0 %v431
    %v433 = vpop.xlane.xlu0 %432
    %v434 = vmax.f32 %v426, %v427
    %435 = vmax.xlane.f32.xlu0 %v434
    %v436 = vpop.xlane.xlu0 %435
    %437 = vst.msk [vmem:[%s3 + $0x48] sm:$0xff] %vm364, %v430
    %438 = vst.msk [vmem:[%s3 + $0x50] sm:$0xff] %vm364, %v433
    %439 = vst.msk [vmem:[%s3 + $0x58] sm:$0xff] %vm364, %v436
    // Predicated region
    $region18: #{tpu_custom_call.1} parent=1 // pred_check
      _
    $region19: #{tpu_custom_call.1} parent=1 // pred_check_branch
      %441 = sbr.rel (0) target = $region21
    $region20: #{tpu_custom_call.1} parent=1 // pred_region
      _
    $region21: #{tpu_custom_call.1} parent=1 // pred_fallthru
      _
    // Predicated region
    $region22: #{tpu_custom_call.1} parent=1 // pred_check
      _
    $region23: #{tpu_custom_call.1} parent=1 // pred_check_branch
      %443 = sbr.rel (0) target = $region25
    $region24: #{tpu_custom_call.1} parent=1 // pred_region
      _
    $region25: #{tpu_custom_call.1} parent=1 // pred_fallthru
      _
    %444 = vsyncpa [#allocation3], 1

</llo_original>
